<compile_context>
chip_gen: v6e
topology: v6e:2x2x1
jax: 0.10.0
libtpu: 0.0.40
codegen_flags: <defaults>
</compile_context>

<pallas_src>
import functools

import jax
import jax.numpy as jnp
from jax.experimental import pallas as pl
from jax.experimental.pallas import tpu as pltpu


def _calc_padding_1d(input_size, kernel_size, stride=1):
    # Mirror of pytorch_utils.calc_padding_1d (for stride=1 this is (K-1)//2
    # regardless of input_size, so calling it with n_timesteps is equivalent).
    return int(((input_size - 1) * stride + kernel_size - input_size) / 2.0)


def _channelwise1d_kernel(x_ref, wb_ref, o_ref, *, kernel_size, dilation, pad,
                          c_in, out_len):
    # x_ref : (bn, C, Lt)        input tile; conv axis C on sublanes, Lt lanes
    # wb_ref: (K + 1, Lt)        rows 0..K-1 = per-lane taps, row K = bias (f32)
    # o_ref : (bn, out_len, Lt)  output tile
    bn, o_rows, lt = o_ref.shape
    assert o_rows == out_len

    shifts = [k * dilation - pad for k in range(kernel_size)]

    # Output rows where every tap reads in-range input (the conv interior).
    bulk_lo, bulk_hi = 0, out_len
    for s in shifts:
        bulk_lo = max(bulk_lo, -s)
        bulk_hi = min(bulk_hi, c_in - s)
    bulk_lo = min(max(bulk_lo, 0), out_len)
    bulk_hi = min(max(bulk_hi, bulk_lo), out_len)

    bias = wb_ref[kernel_size:kernel_size + 1, :][None]              # (1,1,Lt) f32
    w_taps = [wb_ref[k:k + 1, :][None] for k in range(kernel_size)]  # (1,1,Lt) f32

    def accumulate(lo, hi):
        # Single-pass f32 accumulation over output rows [lo, hi):
        #   acc = bias + sum_k shifted_x * w_k, then exactly one store and one
        # final cast.  o_ref is never read.
        acc = jnp.broadcast_to(bias, (bn, hi - lo, lt))
        for w_k, s in zip(w_taps, shifts):
            if lo + s < 0 or hi + s > c_in:
                continue                                  # tap OOB (edge rows only)
            x_win = x_ref[:, lo + s:hi + s, :].astype(jnp.float32)
            acc = acc + x_win * w_k
        o_ref[:, lo:hi, :] = acc.astype(o_ref.dtype)

    if bulk_hi > bulk_lo:
        accumulate(bulk_lo, bulk_hi)          # one store covers the interior
    for j in range(0, bulk_lo):               # head edge rows (<= pad of them)
        accumulate(j, j + 1)
    for j in range(bulk_hi, out_len):         # tail edge rows (<= pad of them)
        accumulate(j, j + 1)


def _vmem_budget_and_limit():
    """Generation-gated VMEM sizing: ~60% of physical VMEM (capped at 48 MiB)
    for the pipelined tile working set, plus an explicit scoped-VMEM limit that
    is well above the 16/32 MiB defaults but safe on v7x (64 MiB physical)."""
    try:
        cap = int(pltpu.get_tpu_info().vmem_capacity_bytes)
    except Exception:
        cap = 64 * 1024 * 1024            # conservative (v7x-sized) fallback
    budget = min(48 * 1024 * 1024, int(cap * 0.6))
    limit = max(32 * 1024 * 1024, min(int(cap * 0.75), budget + 16 * 1024 * 1024))
    return budget, limit


def _choose_tiling(n, c, out_len, lanes, itemsize, kernel_size, budget):
    """Pick (block_n, lane_tile): double-buffered in/out blocks plus the
    in-kernel f32 working values must fit `budget`; prefer >= 2 total grid
    steps (pipelining + both v7x TensorCores), exact 128-multiple lane
    tilings, and the largest tile that fits (amortizes per-step overhead)."""
    # Bytes per (sample, lane) column: 2x double-buffered in+out tiles plus
    # ~3 f32 working copies of the output rows (accumulator + temporaries).
    per_nl = 2 * (c + out_len) * itemsize + 12 * out_len

    def fits(bn, lt):
        return bn * lt * per_nl + 2 * (kernel_size + 1) * lt * 4 <= budget

    # Lane-tile candidates: full extent, 128-multiple divisors of `lanes`
    # (<= 4096 lanes), then ragged 128-multiple fallbacks for awkward shapes.
    cands = [lanes]
    if lanes % 128 == 0:
        q = lanes // 128
        cands += [m * 128 for m in range(min(q, 32), 0, -1) if q % m == 0]
    cands += [lt for lt in (4096, 2048, 1024, 512, 256, 128) if lt < lanes]
    seen = set()
    cands = [lt for lt in cands if not (lt in seen or seen.add(lt))]

    n_divs = [d for d in range(n, 0, -1) if n % d == 0]

    best_key, best = None, None
    for lt in cands:
        lane_steps = -(-lanes // lt)
        exact = (lanes % lt == 0)
        for bn in n_divs:
            if not fits(bn, lt):
                continue
            steps = (n // bn) * lane_steps
            key = (steps >= 2, exact, bn * lt)
            if best_key is None or key > best_key:
                best_key, best = key, (bn, lt)
    if best is not None:
        return best
    # Nothing fits the budget (pathological shape): smallest tile, rely on the
    # raised vmem_limit_bytes headroom.
    return 1, min(cands)


def channelwise_1d_forward(x, weight, bias, kernel_size, dilation):
    """x: (N, C, T, H, W); weight: (T, K) (PyTorch Conv1d weight squeezed);
    bias: (T,).  Returns (N, C_out, T, H, W)."""
    n, c, t, h, w = x.shape
    pad = _calc_padding_1d(t, kernel_size)
    out_len = c + 2 * pad - dilation * (kernel_size - 1)
    assert out_len >= 1, "invalid kernel_size/dilation for this channel count"
    lanes = t * h * w

    # Free reshape (contiguous flatten of trailing dims): (N, C, T*H*W).
    xr = x.reshape(n, c, lanes)

    # Pre-broadcast the tiny per-timestep filters/bias along the THW lane axis
    # into a single packed f32 (K+1, THW) operand.
    w_lanes = jnp.repeat(weight.astype(jnp.float32).T, h * w, axis=1)   # (K, THW)
    b_lanes = jnp.repeat(bias.astype(jnp.float32), h * w)[None, :]      # (1, THW)
    wb = jnp.concatenate([w_lanes, b_lanes], axis=0)                    # (K+1, THW)

    budget, vmem_limit = _vmem_budget_and_limit()
    itemsize = jnp.dtype(x.dtype).itemsize
    block_n, lane_tile = _choose_tiling(n, c, out_len, lanes, itemsize,
                                        kernel_size, budget)
    n_blocks = n // block_n
    lane_blocks = pl.cdiv(lanes, lane_tile)
    # Note: lane tiles are multiples of 128 (lane-dense stores) unless THW
    # itself is not a multiple of 128, in which case the only masked lanes are
    # the unavoidable tail vregs of each row.

    kernel = functools.partial(
        _channelwise1d_kernel,
        kernel_size=kernel_size, dilation=dilation, pad=pad,
        c_in=c, out_len=out_len)

    out = pl.pallas_call(
        kernel,
        out_shape=jax.ShapeDtypeStruct((n, out_len, lanes), x.dtype),
        grid=(n_blocks, lane_blocks),
        in_specs=[
            pl.BlockSpec((block_n, c, lane_tile), lambda i, j: (i, 0, j)),
            pl.BlockSpec((kernel_size + 1, lane_tile), lambda i, j: (0, j)),
        ],
        out_specs=pl.BlockSpec((block_n, out_len, lane_tile),
                               lambda i, j: (i, 0, j)),
        compiler_params=pltpu.CompilerParams(
            dimension_semantics=("parallel", "parallel"),
            vmem_limit_bytes=int(vmem_limit)),
    )(xr, wb)

    # Free reshape back to the module's output layout (N, C_out, T, H, W).
    return out.reshape(n, out_len, t, h, w)


def _reference_forward(x, weight, bias, kernel_size, dilation):
    """Pure-JAX mirror of the PyTorch module (permute -> depthwise Conv1d -> permute)."""
    n, c, t, h, w = x.shape
    pad = _calc_padding_1d(t, kernel_size)
    xr = jnp.transpose(x, (0, 3, 4, 1, 2)).reshape(-1, c, t)
    xr = jnp.transpose(xr, (0, 2, 1))                       # (B, T, C)
    y = jax.lax.conv_general_dilated(
        xr, weight[:, None, :],                             # (T, 1, K)
        window_strides=(1,), padding=[(pad, pad)],
        rhs_dilation=(dilation,),
        dimension_numbers=("NCH", "OIH", "NCH"),
        feature_group_count=t)
    y = y + bias[None, :, None]
    out_len = y.shape[-1]
    y = y.reshape(n, h, w, t, out_len)
    return jnp.transpose(y, (0, 4, 3, 1, 2))


if __name__ == "__main__":
    # Small shapes consistent with the module's (BN, C, T, H, W) convention.
    N, C, T, H, W = 2, 16, 8, 4, 4                # THW = 128 lanes (lane-dense)
    key = jax.random.PRNGKey(0)
    kx, kw, kb = jax.random.split(key, 3)
    x = jax.random.normal(kx, (N, C, T, H, W), dtype=jnp.float32)

    # Exercise both the plain and the dilated (length-changing) boundary paths.
    for kernel_size, dilation in ((3, 1), (3, 2)):
        weight = 0.1 * jax.random.normal(kw, (T, kernel_size), dtype=jnp.float32)
        bias = 0.1 * jax.random.normal(kb, (T,), dtype=jnp.float32)

        out = channelwise_1d_forward(x, weight, bias, kernel_size, dilation)
        out = jax.block_until_ready(out)

        ref = _reference_forward(x, weight, bias, kernel_size, dilation)
        assert out.shape == ref.shape, (out.shape, ref.shape)
        assert jnp.allclose(out, ref, atol=1e-5, rtol=1e-5), \
            f"mismatch vs reference (K={kernel_size}, d={dilation})"

    print("KERNEL_OK")
</pallas_src>

<mosaic_0001>
module attributes {stable_mosaic.version = 11 : i64} {
  func.func @_channelwise1d_kernel(%arg0: i32, %arg1: i32, %arg2: memref<1x16x128xf32, #tpu.memory_space<vmem>>, %arg3: memref<4x128xf32, #tpu.memory_space<vmem>>, %arg4: memref<1x16x128xf32, #tpu.memory_space<vmem>>) attributes {dimension_semantics = [#tpu.dimension_semantics<parallel>, #tpu.dimension_semantics<parallel>], iteration_bounds = array<i64: 2, 1>, scalar_prefetch = 0 : i64, scratch_operands = 0 : i64, tpu.core_type = #tpu.core_type<tc>, window_params = [{transform_indices = @transform_0, window_bounds = array<i64: 1, 16, 128>}, {transform_indices = @transform_1, window_bounds = array<i64: 4, 128>}, {transform_indices = @transform_2, window_bounds = array<i64: 1, 16, 128>}]} {
    %c3 = arith.constant 3 : index
    %c0 = arith.constant 0 : index
    %0 = vector.load %arg3[%c3, %c0] : memref<4x128xf32, #tpu.memory_space<vmem>>, vector<1x128xf32>
    %1 = vector.shape_cast %0 : vector<1x128xf32> to vector<1x1x128xf32>
    %c0_0 = arith.constant 0 : index
    %c0_1 = arith.constant 0 : index
    %2 = vector.load %arg3[%c0_0, %c0_1] : memref<4x128xf32, #tpu.memory_space<vmem>>, vector<1x128xf32>
    %3 = vector.shape_cast %2 : vector<1x128xf32> to vector<1x1x128xf32>
    %c1 = arith.constant 1 : index
    %c0_2 = arith.constant 0 : index
    %4 = vector.load %arg3[%c1, %c0_2] : memref<4x128xf32, #tpu.memory_space<vmem>>, vector<1x128xf32>
    %5 = vector.shape_cast %4 : vector<1x128xf32> to vector<1x1x128xf32>
    %c2 = arith.constant 2 : index
    %c0_3 = arith.constant 0 : index
    %6 = vector.load %arg3[%c2, %c0_3] : memref<4x128xf32, #tpu.memory_space<vmem>>, vector<1x128xf32>
    %7 = vector.shape_cast %6 : vector<1x128xf32> to vector<1x1x128xf32>
    %8 = vector.shape_cast %1 : vector<1x1x128xf32> to vector<1x1x128xf32>
    %9 = vector.broadcast %8 : vector<1x1x128xf32> to vector<1x14x128xf32>
    %c0_4 = arith.constant 0 : index
    %c0_5 = arith.constant 0 : index
    %c0_6 = arith.constant 0 : index
    %10 = vector.load %arg2[%c0_4, %c0_5, %c0_6] : memref<1x16x128xf32, #tpu.memory_space<vmem>>, vector<1x14x128xf32>
    %11 = vector.broadcast %3 : vector<1x1x128xf32> to vector<1x14x128xf32>
    %12 = arith.mulf %10, %11 : vector<1x14x128xf32>
    %13 = arith.addf %9, %12 : vector<1x14x128xf32>
    %c0_7 = arith.constant 0 : index
    %c1_8 = arith.constant 1 : index
    %c0_9 = arith.constant 0 : index
    %14 = vector.load %arg2[%c0_7, %c1_8, %c0_9] : memref<1x16x128xf32, #tpu.memory_space<vmem>>, vector<1x14x128xf32>
    %15 = vector.broadcast %5 : vector<1x1x128xf32> to vector<1x14x128xf32>
    %16 = arith.mulf %14, %15 : vector<1x14x128xf32>
    %17 = arith.addf %13, %16 : vector<1x14x128xf32>
    %c0_10 = arith.constant 0 : index
    %c2_11 = arith.constant 2 : index
    %c0_12 = arith.constant 0 : index
    %18 = vector.load %arg2[%c0_10, %c2_11, %c0_12] : memref<1x16x128xf32, #tpu.memory_space<vmem>>, vector<1x14x128xf32>
    %19 = vector.broadcast %7 : vector<1x1x128xf32> to vector<1x14x128xf32>
    %20 = arith.mulf %18, %19 : vector<1x14x128xf32>
    %21 = arith.addf %17, %20 : vector<1x14x128xf32>
    %c0_13 = arith.constant 0 : index
    %c1_14 = arith.constant 1 : index
    %c0_15 = arith.constant 0 : index
    %22 = vector.load %arg4[%c0_13, %c1_14, %c0_15] : memref<1x16x128xf32, #tpu.memory_space<vmem>>, vector<1x14x128xf32>
    tpu.vector_store %arg4[%c0_13, %c1_14, %c0_15], %21 {strides = array<i32>} : memref<1x16x128xf32, #tpu.memory_space<vmem>>, vector<1x14x128xf32>,
    %c0_16 = arith.constant 0 : index
    %c0_17 = arith.constant 0 : index
    %c0_18 = arith.constant 0 : index
    %23 = vector.load %arg2[%c0_16, %c0_17, %c0_18] : memref<1x16x128xf32, #tpu.memory_space<vmem>>, vector<1x1x128xf32>
    %24 = arith.mulf %23, %5 : vector<1x1x128xf32>
    %25 = arith.addf %1, %24 : vector<1x1x128xf32>
    %c0_19 = arith.constant 0 : index
    %c1_20 = arith.constant 1 : index
    %c0_21 = arith.constant 0 : index
    %26 = vector.load %arg2[%c0_19, %c1_20, %c0_21] : memref<1x16x128xf32, #tpu.memory_space<vmem>>, vector<1x1x128xf32>
    %27 = arith.mulf %26, %7 : vector<1x1x128xf32>
    %28 = arith.addf %25, %27 : vector<1x1x128xf32>
    %c0_22 = arith.constant 0 : index
    %c0_23 = arith.constant 0 : index
    %c0_24 = arith.constant 0 : index
    %29 = vector.load %arg4[%c0_22, %c0_23, %c0_24] : memref<1x16x128xf32, #tpu.memory_space<vmem>>, vector<1x1x128xf32>
    tpu.vector_store %arg4[%c0_22, %c0_23, %c0_24], %28 {strides = array<i32>} : memref<1x16x128xf32, #tpu.memory_space<vmem>>, vector<1x1x128xf32>,
    %c0_25 = arith.constant 0 : index
    %c14 = arith.constant 14 : index
    %c0_26 = arith.constant 0 : index
    %30 = vector.load %arg2[%c0_25, %c14, %c0_26] : memref<1x16x128xf32, #tpu.memory_space<vmem>>, vector<1x1x128xf32>
    %31 = arith.mulf %30, %3 : vector<1x1x128xf32>
    %32 = arith.addf %1, %31 : vector<1x1x128xf32>
    %c0_27 = arith.constant 0 : index
    %c15 = arith.constant 15 : index
    %c0_28 = arith.constant 0 : index
    %33 = vector.load %arg2[%c0_27, %c15, %c0_28] : memref<1x16x128xf32, #tpu.memory_space<vmem>>, vector<1x1x128xf32>
    %34 = arith.mulf %33, %5 : vector<1x1x128xf32>
    %35 = arith.addf %32, %34 : vector<1x1x128xf32>
    %c0_29 = arith.constant 0 : index
    %c15_30 = arith.constant 15 : index
    %c0_31 = arith.constant 0 : index
    %36 = vector.load %arg4[%c0_29, %c15_30, %c0_31] : memref<1x16x128xf32, #tpu.memory_space<vmem>>, vector<1x1x128xf32>
    tpu.vector_store %arg4[%c0_29, %c15_30, %c0_31], %35 {strides = array<i32>} : memref<1x16x128xf32, #tpu.memory_space<vmem>>, vector<1x1x128xf32>,
    return
  }
  func.func @transform_0(%arg0: i32, %arg1: i32) -> (i32, i32, i32) {
    %c0_i32 = arith.constant 0 : i32
    %c0_i32_0 = arith.constant 0 : i32
    return %arg0, %c0_i32, %arg1 : i32, i32, i32
  }
  func.func @transform_1(%arg0: i32, %arg1: i32) -> (i32, i32) {
    %c0_i32 = arith.constant 0 : i32
    %c0_i32_0 = arith.constant 0 : i32
    return %c0_i32, %arg1 : i32, i32
  }
  func.func @transform_2(%arg0: i32, %arg1: i32) -> (i32, i32, i32) {
    %c0_i32 = arith.constant 0 : i32
    %c0_i32_0 = arith.constant 0 : i32
    return %arg0, %c0_i32, %arg1 : i32, i32, i32
  }
}

</mosaic_0001>

<llo_original>
// kernel: tpu_custom_call.1
$region0: #{tpu_custom_call.1}
  #allocation0 [shape = 'u32[]', space=smem, size = 0x4, offset = 0x4, fixed_abs, tag = 'smem constant byte address 0x4 - core index']
  #allocation1 [shape = 'u32[144,128]{1,0:T(1,128)}', space=vmem, size = 0x12000, scoped, tag = 'internal scratch']
  %s0 = inlined_call_operand.hbm [shape: f32[2,16,128], index: 0, kind: input, shape index: {}]
  %s1 = inlined_call_operand.hbm [shape: f32[4,128], index: 1, kind: input, shape index: {}]
  %s2 = inlined_call_operand.hbm [shape: f32[2,16,128], index: 2, kind: output, shape index: {}]
  %s3 = sld [smem:[#allocation0]]
  $region49: #{tpu_custom_call.1} parent=0
    _
  %s5 = ssub.s32 1, %s3
  %s6 = scalar_select 0, %s5, %s3
  $region1: #{tpu_custom_call.1} parent=0
    #allocation2 [shape = 'u8[16384]{0}', space=vmem, size = 0x4000, scoped, tag = 'input window, operand 0']
    #allocation3 [shape = 's32[2]{0}', space=sflag, size = 0x8, scoped, tag = 'scoped memory for tpu_custom_call.1']
    #allocation4 [shape = 's32[2]{0}', space=sflag, size = 0x8, scoped, tag = 'scoped memory for tpu_custom_call.1']
    #allocation5 [shape = 'u8[2048]{0}', space=vmem, size = 0x800, scoped, tag = 'input window, operand 1, single buffered']
    #allocation6 [shape = 's32[1]{0}', space=sflag, size = 0x4, scoped, tag = 'scoped memory for tpu_custom_call.1']
    #allocation7 [shape = 'u8[16384]{0}', space=vmem, size = 0x4000, scoped, tag = 'output window, operand 0']
    %7 = vsyncpa [#allocation3], 0
    %s8 = scalar_lea.sflag [#allocation3], 1
    %9 = vsyncpa %s8, 0
    %10 = vsyncpa [#allocation6], 0
    %11 = vsyncpa [#allocation4], 0
    %s12 = scalar_lea.sflag [#allocation4], 1
    %13 = vsyncpa %s12, 0
    loop: start=0, step=1, limit=4
    $region2: #{tpu_custom_call.1} parent=1 // loop_pre_header
      _
    $region3: #{tpu_custom_call.1} parent=1 // loop_header
      %s15 = sphi 0, %s19
      %p16 = scmp.ge.s32.totalorder %s15, 4
      %s22 = sphi 0, %s34
      %s23 = sphi 0, %s30
      %s24 = sphi 0, %s22
      %s25 = sphi 0, %s23
      %s26 = sphi 0, %s24
      %s27 = sphi 0, %s25
      %s39 = sphi 0, %s41
      %s42 = sphi 0, %s39
      %s43 = sphi 0, %s42
      %s59 = sphi 0, %s43
      %s65 = sphi 0, %s67
      %s68 = sphi 0, %s65
      %s69 = sphi 0, %s68
      %s85 = sphi 0, %s69
      %s93 = sphi 0, %s95
      %s96 = sphi 0, %s93
      %s97 = sphi 0, %s96
      %s113 = sphi 0, %s97
    $region4: #{tpu_custom_call.1} parent=1 // loop_header_branch
      %18 = sbr.rel (%p16) target = $region8
    $region5: #{tpu_custom_call.1} parent=1 // loop_body
      %s20 = ssub.s32 %s15, 1
      %s21 = ssub.s32 %s15, 2
      %s28 = sadd.s32 1, %s23
      %p29 = scmp.ge.s32.totalorder %s28, 1
      %s30 = scalar_select %p29, 0, %s28
      %s31 = sadd.s32 1, %s22
      %s32 = scalar_select %p29, %s31, %s22
      %p33 = scmp.ge.s32.totalorder %s32, 2
      %s34 = scalar_select %p33, 0, %s32
      %s35 = ssub.s32 %s22, %s34
      %s36 = ssub.s32 %s23, %s30
      %s37 = sor.u32 %s35, %s36
      %p38 = scmp.eq.s32.totalorder %s37, 0
      %s40 = sadd.s32 %s39, 1
      %s41 = scalar_select %p38, %s39, %s40
      %p44 = pneg %p38
      %p45 = scmp.eq.s32.totalorder %s15, 1
      %p46 = por %p44, %p45
      %p47 = scmp.ne.s32.totalorder %s39, %s42
      %p48 = scmp.eq.s32.totalorder %s15, 0
      %p49 = por %p47, %p48
      %p50 = scmp.ne.s32.totalorder %s39, %s42
      %p51 = scmp.eq.s32.totalorder %s20, 1
      %p52 = por %p50, %p51
      %p53 = scmp.ne.s32.totalorder %s42, %s43
      %p54 = scmp.eq.s32.totalorder %s20, 0
      %p55 = por %p53, %p54
      %p56 = scmp.ne.s32.totalorder %s42, %s43
      %p57 = scmp.eq.s32.totalorder %s21, 1
      %p58 = por %p56, %p57
      %p60 = scmp.ne.s32.totalorder %s43, %s59
      %p61 = scmp.eq.s32.totalorder %s21, 0
      %p62 = por %p60, %p61
      %s63 = ssub.s32 %s23, %s30
      %p64 = scmp.eq.s32.totalorder %s63, 0
      %s66 = sadd.s32 %s65, 1
      %s67 = scalar_select %p64, %s65, %s66
      %p70 = pneg %p64
      %p71 = scmp.eq.s32.totalorder %s15, 1
      %p72 = por %p70, %p71
      %p73 = scmp.ne.s32.totalorder %s65, %s68
      %p74 = scmp.eq.s32.totalorder %s15, 0
      %p75 = por %p73, %p74
      %p76 = scmp.ne.s32.totalorder %s65, %s68
      %p77 = scmp.eq.s32.totalorder %s20, 1
      %p78 = por %p76, %p77
      %p79 = scmp.ne.s32.totalorder %s68, %s69
      %p80 = scmp.eq.s32.totalorder %s20, 0
      %p81 = por %p79, %p80
      %p82 = scmp.ne.s32.totalorder %s68, %s69
      %p83 = scmp.eq.s32.totalorder %s21, 1
      %p84 = por %p82, %p83
      %p86 = scmp.ne.s32.totalorder %s69, %s85
      %p87 = scmp.eq.s32.totalorder %s21, 0
      %p88 = por %p86, %p87
      %s89 = ssub.s32 %s22, %s34
      %s90 = ssub.s32 %s23, %s30
      %s91 = sor.u32 %s89, %s90
      %p92 = scmp.eq.s32.totalorder %s91, 0
      %s94 = sadd.s32 %s93, 1
      %s95 = scalar_select %p92, %s93, %s94
      %p98 = pneg %p92
      %p99 = scmp.eq.s32.totalorder %s15, 1
      %p100 = por %p98, %p99
      %p101 = scmp.ne.s32.totalorder %s93, %s96
      %p102 = scmp.eq.s32.totalorder %s15, 0
      %p103 = por %p101, %p102
      %p104 = scmp.ne.s32.totalorder %s93, %s96
      %p105 = scmp.eq.s32.totalorder %s20, 1
      %p106 = por %p104, %p105
      %p107 = scmp.ne.s32.totalorder %s96, %s97
      %p108 = scmp.eq.s32.totalorder %s20, 0
      %p109 = por %p107, %p108
      %p110 = scmp.ne.s32.totalorder %s96, %s97
      %p111 = scmp.eq.s32.totalorder %s21, 1
      %p112 = por %p110, %p111
      %p114 = scmp.ne.s32.totalorder %s97, %s113
      %p115 = scmp.eq.s32.totalorder %s21, 0
      %p116 = por %p114, %p115
      %p117 = scmp.le.s32.totalorder 1, %s15
      %p118 = scmp.lt.s32.totalorder %s15, 3
      %p119 = pnand %p117, %p118
      %p120 = pneg %p119
      // Predicated region
      $region9: #{tpu_custom_call.1} parent=5 // pred_check
        _
      $region10: #{tpu_custom_call.1} parent=5 // pred_check_branch
        %122 = sbr.rel (%p119) target = $region12
      $region11: #{tpu_custom_call.1} parent=5 // pred_region
        %s123 = ssub.s32 %s15, 1
        // Predicated region
        $region13: #{tpu_custom_call.1} parent=11 // pred_check
          %p124 = pneg %p81
        $region14: #{tpu_custom_call.1} parent=11 // pred_check_branch
          %126 = sbr.rel (%p124) target = $region16
        $region15: #{tpu_custom_call.1} parent=11 // pred_region
          %s128 = ssub.s32 64, 64
          %129 = vsyncadd [#allocation6], %s128
          %s130 = smul.addr %s25, 64
          %s131 = scalar_lea.hbm %s1, %s130
          %s133 = sshll.u32 [#allocation5], 4
          %s134 = int_to_ptr.vmem [resolvable:$true] %s133
          %136 = dma.hbm_to_vmem [thread:$0]  %s131, 64, %s134, [#allocation6]
        $region16: #{tpu_custom_call.1} parent=11 // pred_fallthru
          _
      $region12: #{tpu_custom_call.1} parent=5 // pred_fallthru
        _
      %p137 = scmp.lt.s32.totalorder %s15, 2
      // Predicated region
      $region17: #{tpu_custom_call.1} parent=5 // pred_check
        %p138 = pneg %p137
      $region18: #{tpu_custom_call.1} parent=5 // pred_check_branch
        %140 = sbr.rel (%p138) target = $region20
      $region19: #{tpu_custom_call.1} parent=5 // pred_region
        // Predicated region
        $region21: #{tpu_custom_call.1} parent=19 // pred_check
          %p141 = pneg %p49
        $region22: #{tpu_custom_call.1} parent=19 // pred_check_branch
          %143 = sbr.rel (%p141) target = $region24
        $region23: #{tpu_custom_call.1} parent=19 // pred_region
          %s144 = sand.u32 %s39, 1
          %s145 = scalar_lea.sflag [#allocation3], %s144
          %s146 = sand.u32 %s39, 1
          %s147 = smul.addr %s146, 16
          %s148 = scalar_lea.vmem [#allocation2], %s147
          %s150 = ssub.s32 256, 256
          %151 = vsyncadd %s145, %s150
          %s152 = smul.addr %s22, 2
          %s153 = sadd.s32 %s23, %s152
          %s154 = smul.addr %s153, 128
          %s155 = scalar_lea.hbm %s0, %s154
          %s156 = sshll.u32 %s148, 4
          %s157 = int_to_ptr.vmem [resolvable:$true] %s156
          %162 = dma.hbm_to_vmem [thread:$0]  %s155, 256, %s157, %s145, 128, 128, 8
        $region24: #{tpu_custom_call.1} parent=19 // pred_fallthru
          _
      $region20: #{tpu_custom_call.1} parent=5 // pred_fallthru
        _
      %p163 = scmp.le.s32.totalorder 1, %s15
      %p164 = scmp.lt.s32.totalorder %s15, 3
      %p165 = pnand %p163, %p164
      %p166 = pneg %p165
      // Predicated region
      $region25: #{tpu_custom_call.1} parent=5 // pred_check
        _
      $region26: #{tpu_custom_call.1} parent=5 // pred_check_branch
        %168 = sbr.rel (%p165) target = $region28
      $region27: #{tpu_custom_call.1} parent=5 // pred_region
        %s169 = ssub.s32 %s15, 1
        %s170 = sand.u32 %s42, 1
        %s171 = scalar_lea.sflag [#allocation3], %s170
        %s172 = sand.u32 %s42, 1
        %s173 = smul.addr %s172, 16
        %s174 = scalar_lea.vmem [#allocation2], %s173
        // Predicated region
        $region29: #{tpu_custom_call.1} parent=27 // pred_check
          %p175 = pneg %p55
        $region30: #{tpu_custom_call.1} parent=27 // pred_check_branch
          %177 = sbr.rel (%p175) target = $region32
        $region31: #{tpu_custom_call.1} parent=27 // pred_region
          %178 = dma.done %s171, 256
        $region32: #{tpu_custom_call.1} parent=27 // pred_fallthru
          _
        // Predicated region
        $region33: #{tpu_custom_call.1} parent=27 // pred_check
          %p179 = pneg %p81
        $region34: #{tpu_custom_call.1} parent=27 // pred_check_branch
          %181 = sbr.rel (%p179) target = $region36
        $region35: #{tpu_custom_call.1} parent=27 // pred_region
          %182 = dma.done [#allocation6], 64
        $region36: #{tpu_custom_call.1} parent=27 // pred_fallthru
          _
        %s183 = sand.u32 %s42, 1
        %s184 = scalar_lea.sflag [#allocation3], %s183
        %s185 = sand.u32 %s42, 1
        %s186 = smul.addr %s185, 16
        %s187 = scalar_lea.vmem [#allocation2], %s186
        %p188 = pneg %p55
        %p189 = pneg %p52
        %p190 = pneg %p81
        %p191 = pneg %p78
        %p192 = pneg %p109
        %p193 = pneg %p106
        %s194 = sand.u32 %s96, 1
        %s195 = scalar_lea.sflag [#allocation4], %s194
        %s196 = sand.u32 %s96, 1
        %s197 = smul.addr %s196, 16
        %s198 = scalar_lea.vmem [#allocation7], %s197
        %v199 = vld [vmem:[#allocation5 + $0x3] sm:$0x1]
        %v200 = vld [vmem:[#allocation5] sm:$0x1]
        %v201 = vld [vmem:[#allocation5 + $0x1] sm:$0x1]
        %v202 = vld [vmem:[#allocation5 + $0x2] sm:$0x1]
        %v203 = vlaneseq
        %v204 = vshrl.u32 %v203, 7
        %v205 = vsub.s32 0, %v204
        %v206 = vrot.slane %v199, %v205
        %v207 = vld [vmem:[%s174] sm:$0xff]
        %v208 = vld [vmem:[%s174 + $0x8] sm:$0x3f]
        %v209 = vlaneseq
        %v210 = vshrl.u32 %v209, 7
        %v211 = vsub.s32 0, %v210
        %v212 = vrot.slane %v200, %v211
        %v213 = vmul.f32 %v207, %v212
        %v214 = vmul.f32 %v208, %v212
        %v215 = vadd.f32 %v206, %v213
        %v216 = vadd.f32 %v206, %v214
        %v217 = vld [vmem:[%s174 + $0x1] sm:$0xff]
        %v218 = vld [vmem:[%s174 + $0x9] sm:$0x3f]
        %v219 = vlaneseq
        %v220 = vshrl.u32 %v219, 7
        %v221 = vsub.s32 0, %v220
        %v222 = vrot.slane %v201, %v221
        %v223 = vmul.f32 %v217, %v222
        %v224 = vmul.f32 %v218, %v222
        %v225 = vadd.f32 %v215, %v223
        %v226 = vadd.f32 %v216, %v224
        %v227 = vld [vmem:[%s174 + $0x2] sm:$0xff]
        %v228 = vld [vmem:[%s174 + $0xa] sm:$0x3f]
        %v229 = vlaneseq
        %v230 = vshrl.u32 %v229, 7
        %v231 = vsub.s32 0, %v230
        %v232 = vrot.slane %v202, %v231
        %v233 = vmul.f32 %v227, %v232
        %v234 = vmul.f32 %v228, %v232
        %v235 = vadd.f32 %v225, %v233
        %v236 = vadd.f32 %v226, %v234
        %237 = vst [vmem:[%s198 + $0x1] sm:$0xff] %v235
        %238 = vst [vmem:[%s198 + $0x9] sm:$0x3f] %v236
        %v239 = vld [vmem:[%s174] sm:$0x1]
        %v240 = vmul.f32 %v239, %v201
        %v241 = vadd.f32 %v199, %v240
        %v242 = vld [vmem:[%s174 + $0x1] sm:$0x1]
        %v243 = vmul.f32 %v242, %v202
        %v244 = vadd.f32 %v241, %v243
        %245 = vst [vmem:[%s198] sm:$0x1] %v244
        %v246 = vld [vmem:[%s174 + $0xe] sm:$0x1]
        %v247 = vmul.f32 %v246, %v200
        %v248 = vadd.f32 %v199, %v247
        %v249 = vld [vmem:[%s174 + $0xf] sm:$0x1]
        %v250 = vmul.f32 %v249, %v201
        %v251 = vadd.f32 %v248, %v250
        %252 = vst [vmem:[%s198 + $0xf] sm:$0x1] %v251
        %s253 = sand.u32 %s96, 1
        %s254 = scalar_lea.sflag [#allocation4], %s253
        %s255 = sand.u32 %s96, 1
        %s256 = smul.addr %s255, 16
        %s257 = scalar_lea.vmem [#allocation7], %s256
        // Predicated region
        $region37: #{tpu_custom_call.1} parent=27 // pred_check
          %p258 = pneg %p106
        $region38: #{tpu_custom_call.1} parent=27 // pred_check_branch
          %260 = sbr.rel (%p258) target = $region40
        $region39: #{tpu_custom_call.1} parent=27 // pred_region
          %s262 = ssub.s32 256, 256
          %263 = vsyncadd %s254, %s262
          %s264 = smul.addr %s24, 2
          %s265 = sadd.s32 %s25, %s264
          %s266 = smul.addr %s265, 128
          %s267 = scalar_lea.hbm %s2, %s266
          %s268 = sshll.u32 %s257, 4
          %s269 = int_to_ptr.vmem [resolvable:$true] %s268
          %274 = dma.vmem_to_hbm [thread:$0]  %s269, 256, %s267, %s254, 128, 128, 8
        $region40: #{tpu_custom_call.1} parent=27 // pred_fallthru
          _
      $region28: #{tpu_custom_call.1} parent=5 // pred_fallthru
        _
      %p275 = scmp.le.s32.totalorder 2, %s15
      // Predicated region
      $region41: #{tpu_custom_call.1} parent=5 // pred_check
        %p276 = pneg %p275
      $region42: #{tpu_custom_call.1} parent=5 // pred_check_branch
        %278 = sbr.rel (%p276) target = $region44
      $region43: #{tpu_custom_call.1} parent=5 // pred_region
        %s279 = ssub.s32 %s15, 2
        // Predicated region
        $region45: #{tpu_custom_call.1} parent=43 // pred_check
          %p280 = pneg %p112
        $region46: #{tpu_custom_call.1} parent=43 // pred_check_branch
          %282 = sbr.rel (%p280) target = $region48
        $region47: #{tpu_custom_call.1} parent=43 // pred_region
          %s283 = sand.u32 %s97, 1
          %s284 = scalar_lea.sflag [#allocation4], %s283
          %s285 = sand.u32 %s97, 1
          %s286 = smul.addr %s285, 16
          %s287 = scalar_lea.vmem [#allocation7], %s286
          %288 = dma.done %s284, 256
        $region48: #{tpu_custom_call.1} parent=43 // pred_fallthru
          _
      $region44: #{tpu_custom_call.1} parent=5 // pred_fallthru
        _
    $region6: #{tpu_custom_call.1} parent=1 // loop_footer
      %s19 = sadd.s32 1, %s15
    $region7: #{tpu_custom_call.1} parent=1 // loop_footer_branch
      %14 = sbr.rel target = $region3
    $region8: #{tpu_custom_call.1} parent=1 // loop_exit
      _
    %289 = vsyncpa [#allocation3], 1
    %s290 = scalar_lea.sflag [#allocation3], 1
    %291 = vsyncpa %s290, 1
    %292 = vsyncpa [#allocation6], 1
    %293 = vsyncpa [#allocation4], 1
    %s294 = scalar_lea.sflag [#allocation4], 1
    %295 = vsyncpa %s294, 1

</llo_original>
